<compile_context>
chip_gen: v7x
topology: tpu7x:2x2x1
jax: 0.10.0
libtpu: 0.0.40
codegen_flags: <defaults>
</compile_context>

<pallas_src>
import jax
import jax.numpy as jnp
from jax import lax
from jax.experimental import pallas as pl
from jax.experimental.pallas import tpu as pltpu


def autopad(k, p=None):
    if p is None:
        p = k // 2 if isinstance(k, int) else [x // 2 for x in k]
    return p


def _round_up(x, m):
    return (x + m - 1) // m * m


# --------------------------------------------------------------------------
# Pallas kernel: tiled matmul with fused BN (scale/shift) + SiLU epilogue.
# --------------------------------------------------------------------------
def _conv_bn_silu_kernel(p_ref, w_ref, scale_ref, shift_ref, o_ref, acc_ref):
    """p_ref:(tm,tk)  w_ref:(tk,tn)  scale/shift:(1,tn)  o_ref:(tm,tn)."""
    kk = pl.program_id(2)

    @pl.when(kk == 0)
    def _():
        acc_ref[...] = jnp.zeros_like(acc_ref)

    acc_ref[...] += jnp.dot(p_ref[...], w_ref[...],
                            preferred_element_type=jnp.float32)

    @pl.when(kk == pl.num_programs(2) - 1)
    def _():
        y = acc_ref[...] * scale_ref[...] + shift_ref[...]   # folded BatchNorm
        o_ref[...] = (y * jax.nn.sigmoid(y)).astype(o_ref.dtype)  # SiLU


def _fused_matmul_bn_silu(patches, w, scale, shift, *, tm=256, tn=256, tk=256):
    """SiLU(scale * (patches @ w) + shift), tiled for TPU."""
    M, K = patches.shape
    _, N = w.shape

    # Tile sizes: clamp to the (padded) problem so small problems use 1 block.
    tm = min(tm, _round_up(M, 8))
    tn = min(tn, _round_up(N, 128))
    tk = min(tk, _round_up(K, 128))
    Mp, Kp, Np = _round_up(M, tm), _round_up(K, tk), _round_up(N, tn)

    p_pad = jnp.pad(patches, ((0, Mp - M), (0, Kp - K)))
    w_pad = jnp.pad(w, ((0, Kp - K), (0, Np - N)))
    scale_pad = jnp.pad(scale.reshape(1, N), ((0, 0), (0, Np - N)))
    shift_pad = jnp.pad(shift.reshape(1, N), ((0, 0), (0, Np - N)))

    grid = (Mp // tm, Np // tn, Kp // tk)

    # Explicit scoped-VMEM budget: double-buffered inputs/outputs + accumulator,
    # 2x headroom, capped at 32 MiB so it is safe on v5e/v6e/v7x.
    vmem_bytes = 4 * (2 * (tm * tk + tk * tn + 2 * tn + tm * tn) + tm * tn)
    vmem_limit = int(min(max(2 * vmem_bytes, 4 << 20), 32 << 20))

    out = pl.pallas_call(
        _conv_bn_silu_kernel,
        out_shape=jax.ShapeDtypeStruct((Mp, Np), jnp.float32),
        grid_spec=pltpu.PrefetchScalarGridSpec(
            num_scalar_prefetch=0,
            grid=grid,
            in_specs=[
                pl.BlockSpec((tm, tk), lambda i, j, k: (i, k)),   # patches
                pl.BlockSpec((tk, tn), lambda i, j, k: (k, j)),   # weights
                pl.BlockSpec((1, tn), lambda i, j, k: (0, j)),    # BN scale
                pl.BlockSpec((1, tn), lambda i, j, k: (0, j)),    # BN shift
            ],
            out_specs=pl.BlockSpec((tm, tn), lambda i, j, k: (i, j)),
            scratch_shapes=[pltpu.VMEM((tm, tn), jnp.float32)],
        ),
        compiler_params=pltpu.CompilerParams(
            dimension_semantics=("parallel", "parallel", "arbitrary"),
            vmem_limit_bytes=vmem_limit,
        ),
    )(p_pad, w_pad, scale_pad, shift_pad)

    return out[:M, :N]


# --------------------------------------------------------------------------
# Wrapper: im2col (layout only) + grouped GEMM calls.
# --------------------------------------------------------------------------
def _extract_patches(x_nhwc, k, s, p):
    """(B,H,W,C) -> (B,OH,OW,k*k*C) with K ordered (kh, kw, c)."""
    B, H, W, C = x_nhwc.shape
    xp = jnp.pad(x_nhwc, ((0, 0), (p, p), (p, p), (0, 0)))
    Hp, Wp = H + 2 * p, W + 2 * p
    OH = (Hp - k) // s + 1
    OW = (Wp - k) // s + 1
    cols = []
    for kh in range(k):
        for kw in range(k):
            sl = lax.slice(
                xp,
                (0, kh, kw, 0),
                (B, kh + (OH - 1) * s + 1, kw + (OW - 1) * s + 1, C),
                (1, s, s, 1))
            cols.append(sl)                      # (B, OH, OW, C)
    patches = jnp.stack(cols, axis=3)            # (B, OH, OW, k*k, C)
    return patches.reshape(B, OH, OW, k * k * C), OH, OW


def conv_bn_silu(x, weight, gamma, beta, running_mean, running_var,
                 *, k=1, s=1, p=None, g=1, eps=1e-5):
    """PyTorch `Conv.forward`: SiLU(BN(Conv2d(x.float()))), NCHW in/out."""
    p = autopad(k, p)
    x = x.astype(jnp.float32)                    # x.float()
    B, C1, H, W = x.shape
    C2 = weight.shape[0]
    cg, og = C1 // g, C2 // g

    scale = gamma / jnp.sqrt(running_var + eps)
    shift = beta - running_mean * scale

    x_nhwc = jnp.transpose(x, (0, 2, 3, 1))
    outs = []
    OH = OW = None
    for gi in range(g):
        xg = x_nhwc[..., gi * cg:(gi + 1) * cg]
        patches, OH, OW = _extract_patches(xg, k, s, p)
        M = B * OH * OW
        pm = patches.reshape(M, k * k * cg)
        wg = weight[gi * og:(gi + 1) * og]                       # (og, cg, k, k)
        wm = jnp.transpose(wg, (2, 3, 1, 0)).reshape(k * k * cg, og)
        yg = _fused_matmul_bn_silu(pm, wm,
                                   scale[gi * og:(gi + 1) * og],
                                   shift[gi * og:(gi + 1) * og])
        outs.append(yg.reshape(B, OH, OW, og))
    out = jnp.concatenate(outs, axis=-1) if g > 1 else outs[0]
    return jnp.transpose(out, (0, 3, 1, 2))      # back to NCHW


# --------------------------------------------------------------------------
# Pure-JAX reference mirroring the PyTorch forward (inference-mode BN).
# --------------------------------------------------------------------------
def reference(x, weight, gamma, beta, running_mean, running_var,
              *, k=1, s=1, p=None, g=1, eps=1e-5):
    p = autopad(k, p)
    x = x.astype(jnp.float32)
    y = lax.conv_general_dilated(
        x, weight, window_strides=(s, s), padding=[(p, p), (p, p)],
        dimension_numbers=("NCHW", "OIHW", "NCHW"),
        feature_group_count=g, precision=lax.Precision.HIGHEST)
    sc = (gamma / jnp.sqrt(running_var + eps)).reshape(1, -1, 1, 1)
    sh = (beta - running_mean * gamma / jnp.sqrt(running_var + eps)).reshape(1, -1, 1, 1)
    y = y * sc + sh
    return y * jax.nn.sigmoid(y)


if __name__ == "__main__":
    # Small shapes consistent with the module: Conv(c1=4, c2=8, k=3, s=1).
    B, C1, H, W = 2, 4, 16, 16
    C2, k, s, g = 8, 3, 1, 1

    key = jax.random.PRNGKey(0)
    kx, kw_, kg_, kb_, km_, kv_ = jax.random.split(key, 6)
    x = jax.random.normal(kx, (B, C1, H, W), dtype=jnp.float32)
    weight = jax.random.normal(kw_, (C2, C1 // g, k, k), dtype=jnp.float32) * 0.1
    gamma = 1.0 + 0.1 * jax.random.normal(kg_, (C2,), dtype=jnp.float32)
    beta = 0.1 * jax.random.normal(kb_, (C2,), dtype=jnp.float32)
    running_mean = 0.1 * jax.random.normal(km_, (C2,), dtype=jnp.float32)
    running_var = jnp.abs(jax.random.normal(kv_, (C2,), dtype=jnp.float32)) + 0.5

    y = conv_bn_silu(x, weight, gamma, beta, running_mean, running_var,
                     k=k, s=s, g=g)
    y = jax.block_until_ready(y)

    y_ref = reference(x, weight, gamma, beta, running_mean, running_var,
                      k=k, s=s, g=g)
    assert y.shape == y_ref.shape == (B, C2, H, W)
    assert jnp.allclose(y, y_ref, atol=2e-3, rtol=2e-3), \
        float(jnp.max(jnp.abs(y - y_ref)))

    print("KERNEL_OK")
</pallas_src>

<mosaic_0001>
module attributes {stable_mosaic.version = 11 : i64} {
  func.func @_conv_bn_silu_kernel(%arg0: i32, %arg1: i32, %arg2: i32, %arg3: memref<256x128xf32, #tpu.memory_space<vmem>>, %arg4: memref<128x128xf32, #tpu.memory_space<vmem>>, %arg5: memref<1x128xf32, #tpu.memory_space<vmem>>, %arg6: memref<1x128xf32, #tpu.memory_space<vmem>>, %arg7: memref<256x128xf32, #tpu.memory_space<vmem>>, %arg8: memref<256x128xf32, #tpu.memory_space<vmem>>) attributes {dimension_semantics = [#tpu.dimension_semantics<parallel>, #tpu.dimension_semantics<parallel>, #tpu.dimension_semantics<arbitrary>], iteration_bounds = array<i64: 2, 1, 1>, scalar_prefetch = 0 : i64, scratch_operands = 1 : i64, tpu.core_type = #tpu.core_type<tc>, window_params = [{transform_indices = @transform_0, window_bounds = array<i64: 256, 128>}, {transform_indices = @transform_1, window_bounds = array<i64: 128, 128>}, {transform_indices = @transform_2, window_bounds = array<i64: 1, 128>}, {transform_indices = @transform_3, window_bounds = array<i64: 1, 128>}, {transform_indices = @transform_4, window_bounds = array<i64: 256, 128>}]} {
    %c0_i32 = arith.constant 0 : i32
    %0 = arith.cmpi eq, %arg2, %c0_i32 : i32
    %1 = arith.extui %0 : i1 to i32
    %c0_i32_0 = arith.constant 0 : i32
    %2 = arith.cmpi ne, %1, %c0_i32_0 : i32
    scf.if %2 {
      %cst_10 = arith.constant 0.000000e+00 : f32
      %12 = vector.broadcast %cst_10 : f32 to vector<256x128xf32>
      %c0_11 = arith.constant 0 : index
      %c0_12 = arith.constant 0 : index
      %13 = vector.load %arg8[%c0_11, %c0_12] : memref<256x128xf32, #tpu.memory_space<vmem>>, vector<256x128xf32>
      tpu.vector_store %arg8[%c0_11, %c0_12], %12 {strides = array<i32>} : memref<256x128xf32, #tpu.memory_space<vmem>>, vector<256x128xf32>,
    } else {
    }
    %c0 = arith.constant 0 : index
    %c0_1 = arith.constant 0 : index
    %3 = vector.load %arg8[%c0, %c0_1] : memref<256x128xf32, #tpu.memory_space<vmem>>, vector<256x128xf32>
    %c0_2 = arith.constant 0 : index
    %c0_3 = arith.constant 0 : index
    %4 = vector.load %arg3[%c0_2, %c0_3] : memref<256x128xf32, #tpu.memory_space<vmem>>, vector<256x128xf32>
    %c0_4 = arith.constant 0 : index
    %c0_5 = arith.constant 0 : index
    %5 = vector.load %arg4[%c0_4, %c0_5] : memref<128x128xf32, #tpu.memory_space<vmem>>, vector<128x128xf32>
    %cst = arith.constant dense<0.000000e+00> : vector<256x128xf32>
    %6 = tpu.matmul %4, %5, %cst {dimension_numbers = #tpu.dot_dimension_numbers<[1], [0], [0], [1], [0, 0, 1, 1], [], []>} : vector<256x128xf32>, vector<128x128xf32>, vector<256x128xf32> -> vector<256x128xf32>
    %7 = arith.addf %3, %6 : vector<256x128xf32>
    %c0_6 = arith.constant 0 : index
    %c0_7 = arith.constant 0 : index
    %8 = vector.load %arg8[%c0_6, %c0_7] : memref<256x128xf32, #tpu.memory_space<vmem>>, vector<256x128xf32>
    tpu.vector_store %arg8[%c0_6, %c0_7], %7 {strides = array<i32>} : memref<256x128xf32, #tpu.memory_space<vmem>>, vector<256x128xf32>,
    %c0_i32_8 = arith.constant 0 : i32
    %9 = arith.cmpi eq, %arg2, %c0_i32_8 : i32
    %10 = arith.extui %9 : i1 to i32
    %c0_i32_9 = arith.constant 0 : i32
    %11 = arith.cmpi ne, %10, %c0_i32_9 : i32
    scf.if %11 {
      %c0_10 = arith.constant 0 : index
      %c0_11 = arith.constant 0 : index
      %12 = vector.load %arg8[%c0_10, %c0_11] : memref<256x128xf32, #tpu.memory_space<vmem>>, vector<256x128xf32>
      %c0_12 = arith.constant 0 : index
      %c0_13 = arith.constant 0 : index
      %13 = vector.load %arg5[%c0_12, %c0_13] : memref<1x128xf32, #tpu.memory_space<vmem>>, vector<1x128xf32>
      %14 = vector.broadcast %13 : vector<1x128xf32> to vector<256x128xf32>
      %15 = arith.mulf %12, %14 : vector<256x128xf32>
      %c0_14 = arith.constant 0 : index
      %c0_15 = arith.constant 0 : index
      %16 = vector.load %arg6[%c0_14, %c0_15] : memref<1x128xf32, #tpu.memory_space<vmem>>, vector<1x128xf32>
      %17 = vector.broadcast %16 : vector<1x128xf32> to vector<256x128xf32>
      %18 = arith.addf %15, %17 : vector<256x128xf32>
      %19 = arith.negf %18 : vector<256x128xf32>
      %20 = math.exp %19 : vector<256x128xf32>
      %cst_16 = arith.constant 1.000000e+00 : f32
      %21 = vector.broadcast %cst_16 : f32 to vector<256x128xf32>
      %22 = arith.addf %21, %20 : vector<256x128xf32>
      %23 = arith.divf %21, %22 : vector<256x128xf32>
      %24 = arith.mulf %18, %23 : vector<256x128xf32>
      %c0_17 = arith.constant 0 : index
      %c0_18 = arith.constant 0 : index
      %25 = vector.load %arg7[%c0_17, %c0_18] : memref<256x128xf32, #tpu.memory_space<vmem>>, vector<256x128xf32>
      tpu.vector_store %arg7[%c0_17, %c0_18], %24 {strides = array<i32>} : memref<256x128xf32, #tpu.memory_space<vmem>>, vector<256x128xf32>,
    } else {
    }
    return
  }
  func.func @transform_0(%arg0: i32, %arg1: i32, %arg2: i32) -> (i32, i32) {
    %c0_i32 = arith.constant 0 : i32
    return %arg0, %arg2 : i32, i32
  }
  func.func @transform_1(%arg0: i32, %arg1: i32, %arg2: i32) -> (i32, i32) {
    %c0_i32 = arith.constant 0 : i32
    return %arg2, %arg1 : i32, i32
  }
  func.func @transform_2(%arg0: i32, %arg1: i32, %arg2: i32) -> (i32, i32) {
    %c0_i32 = arith.constant 0 : i32
    %c0_i32_0 = arith.constant 0 : i32
    return %c0_i32, %arg1 : i32, i32
  }
  func.func @transform_3(%arg0: i32, %arg1: i32, %arg2: i32) -> (i32, i32) {
    %c0_i32 = arith.constant 0 : i32
    %c0_i32_0 = arith.constant 0 : i32
    return %c0_i32, %arg1 : i32, i32
  }
  func.func @transform_4(%arg0: i32, %arg1: i32, %arg2: i32) -> (i32, i32) {
    %c0_i32 = arith.constant 0 : i32
    return %arg0, %arg1 : i32, i32
  }
}

</mosaic_0001>

<llo_original>
// kernel: tpu_custom_call.1
$region0: #{tpu_custom_call.1}
  #allocation0 [shape = 'u32[]', space=smem, size = 0x4, offset = 0x4, fixed_abs, tag = 'smem constant byte address 0x4 - core index']
  #allocation1 [shape = 'u32[144,128]{1,0:T(1,128)}', space=vmem, size = 0x12000, scoped, tag = 'internal scratch']
  #allocation2 [shape = 'f32[256,128]{1,0:T(8,128)}', space=vmem, size = 0x20000, scoped, tag = 'scratch operand']
  %s0 = inlined_call_operand.hbm [shape: f32[512,128], index: 0, kind: input, shape index: {}]
  %s1 = inlined_call_operand.hbm [shape: f32[128,128], index: 1, kind: input, shape index: {}]
  %s2 = inlined_call_operand.vmem [shape: f32[1,128], index: 2, kind: input, shape index: {}]
  %s3 = inlined_call_operand.vmem [shape: f32[1,128], index: 3, kind: input, shape index: {}]
  %s4 = inlined_call_operand.hbm [shape: f32[512,128], index: 4, kind: output, shape index: {}]
  %s5 = sld [smem:[#allocation0]]
  $region65: #{tpu_custom_call.1} parent=0
    _
  %s7 = ssub.s32 1, %s5
  %s8 = scalar_select 0, %s7, %s5
  $region1: #{tpu_custom_call.1} parent=0
    #allocation3 [shape = 'u8[262144]{0}', space=vmem, size = 0x40000, scoped, tag = 'input window, operand 0']
    #allocation4 [shape = 's32[2]{0}', space=sflag, size = 0x8, scoped, tag = 'scoped memory for tpu_custom_call.1']
    #allocation5 [shape = 's32[2]{0}', space=sflag, size = 0x8, scoped, tag = 'scoped memory for tpu_custom_call.1']
    #allocation6 [shape = 'u8[65536]{0}', space=vmem, size = 0x10000, scoped, tag = 'input window, operand 1, single buffered']
    #allocation7 [shape = 's32[1]{0}', space=sflag, size = 0x4, scoped, tag = 'scoped memory for tpu_custom_call.1']
    #allocation8 [shape = 'u8[262144]{0}', space=vmem, size = 0x40000, scoped, tag = 'output window, operand 0']
    %9 = vsyncpa [#allocation4], 0
    %s10 = scalar_lea.sflag [#allocation4], 1
    %11 = vsyncpa %s10, 0
    %12 = vsyncpa [#allocation7], 0
    %13 = vsyncpa [#allocation5], 0
    %s14 = scalar_lea.sflag [#allocation5], 1
    %15 = vsyncpa %s14, 0
    loop: start=0, step=1, limit=4
    $region2: #{tpu_custom_call.1} parent=1 // loop_pre_header
      _
    $region3: #{tpu_custom_call.1} parent=1 // loop_header
      %s17 = sphi 0, %s21
      %p18 = scmp.ge.s32.totalorder %s17, 4
      %s24 = sphi 0, %s43
      %s25 = sphi 0, %s39
      %s26 = sphi 0, %s35
      %s27 = sphi 0, %s24
      %s28 = sphi 0, %s25
      %s29 = sphi 0, %s26
      %s30 = sphi 0, %s27
      %s31 = sphi 0, %s28
      %s32 = sphi 0, %s29
      %s48 = sphi 0, %s50
      %s51 = sphi 0, %s48
      %s52 = sphi 0, %s51
      %s68 = sphi 0, %s52
      %s76 = sphi 0, %s78
      %s79 = sphi 0, %s76
      %s80 = sphi 0, %s79
      %s96 = sphi 0, %s80
      %s102 = sphi 0, %s104
      %s105 = sphi 0, %s102
      %s106 = sphi 0, %s105
      %s122 = sphi 0, %s106
      %s128 = sphi 0, %s130
      %s131 = sphi 0, %s128
      %s132 = sphi 0, %s131
      %s148 = sphi 0, %s132
      %s156 = sphi 0, %s158
      %s159 = sphi 0, %s156
      %s160 = sphi 0, %s159
      %s176 = sphi 0, %s160
    $region4: #{tpu_custom_call.1} parent=1 // loop_header_branch
      %20 = sbr.rel (%p18) target = $region8
    $region5: #{tpu_custom_call.1} parent=1 // loop_body
      %s22 = ssub.s32 %s17, 1
      %s23 = ssub.s32 %s17, 2
      %s33 = sadd.s32 1, %s26
      %p34 = scmp.ge.s32.totalorder %s33, 1
      %s35 = scalar_select %p34, 0, %s33
      %s36 = sadd.s32 1, %s25
      %s37 = scalar_select %p34, %s36, %s25
      %p38 = scmp.ge.s32.totalorder %s37, 1
      %s39 = scalar_select %p38, 0, %s37
      %s40 = sadd.s32 1, %s24
      %s41 = scalar_select %p38, %s40, %s24
      %p42 = scmp.ge.s32.totalorder %s41, 2
      %s43 = scalar_select %p42, 0, %s41
      %s44 = ssub.s32 %s24, %s43
      %s45 = ssub.s32 %s26, %s35
      %s46 = sor.u32 %s44, %s45
      %p47 = scmp.eq.s32.totalorder %s46, 0
      %s49 = sadd.s32 %s48, 1
      %s50 = scalar_select %p47, %s48, %s49
      %p53 = pneg %p47
      %p54 = scmp.eq.s32.totalorder %s17, 1
      %p55 = por %p53, %p54
      %p56 = scmp.ne.s32.totalorder %s48, %s51
      %p57 = scmp.eq.s32.totalorder %s17, 0
      %p58 = por %p56, %p57
      %p59 = scmp.ne.s32.totalorder %s48, %s51
      %p60 = scmp.eq.s32.totalorder %s22, 1
      %p61 = por %p59, %p60
      %p62 = scmp.ne.s32.totalorder %s51, %s52
      %p63 = scmp.eq.s32.totalorder %s22, 0
      %p64 = por %p62, %p63
      %p65 = scmp.ne.s32.totalorder %s51, %s52
      %p66 = scmp.eq.s32.totalorder %s23, 1
      %p67 = por %p65, %p66
      %p69 = scmp.ne.s32.totalorder %s52, %s68
      %p70 = scmp.eq.s32.totalorder %s23, 0
      %p71 = por %p69, %p70
      %s72 = ssub.s32 %s26, %s35
      %s73 = ssub.s32 %s25, %s39
      %s74 = sor.u32 %s72, %s73
      %p75 = scmp.eq.s32.totalorder %s74, 0
      %s77 = sadd.s32 %s76, 1
      %s78 = scalar_select %p75, %s76, %s77
      %p81 = pneg %p75
      %p82 = scmp.eq.s32.totalorder %s17, 1
      %p83 = por %p81, %p82
      %p84 = scmp.ne.s32.totalorder %s76, %s79
      %p85 = scmp.eq.s32.totalorder %s17, 0
      %p86 = por %p84, %p85
      %p87 = scmp.ne.s32.totalorder %s76, %s79
      %p88 = scmp.eq.s32.totalorder %s22, 1
      %p89 = por %p87, %p88
      %p90 = scmp.ne.s32.totalorder %s79, %s80
      %p91 = scmp.eq.s32.totalorder %s22, 0
      %p92 = por %p90, %p91
      %p93 = scmp.ne.s32.totalorder %s79, %s80
      %p94 = scmp.eq.s32.totalorder %s23, 1
      %p95 = por %p93, %p94
      %p97 = scmp.ne.s32.totalorder %s80, %s96
      %p98 = scmp.eq.s32.totalorder %s23, 0
      %p99 = por %p97, %p98
      %s100 = ssub.s32 %s25, %s39
      %p101 = scmp.eq.s32.totalorder %s100, 0
      %s103 = sadd.s32 %s102, 1
      %s104 = scalar_select %p101, %s102, %s103
      %p107 = pneg %p101
      %p108 = scmp.eq.s32.totalorder %s17, 1
      %p109 = por %p107, %p108
      %p110 = scmp.ne.s32.totalorder %s102, %s105
      %p111 = scmp.eq.s32.totalorder %s17, 0
      %p112 = por %p110, %p111
      %p113 = scmp.ne.s32.totalorder %s102, %s105
      %p114 = scmp.eq.s32.totalorder %s22, 1
      %p115 = por %p113, %p114
      %p116 = scmp.ne.s32.totalorder %s105, %s106
      %p117 = scmp.eq.s32.totalorder %s22, 0
      %p118 = por %p116, %p117
      %p119 = scmp.ne.s32.totalorder %s105, %s106
      %p120 = scmp.eq.s32.totalorder %s23, 1
      %p121 = por %p119, %p120
      %p123 = scmp.ne.s32.totalorder %s106, %s122
      %p124 = scmp.eq.s32.totalorder %s23, 0
      %p125 = por %p123, %p124
      %s126 = ssub.s32 %s25, %s39
      %p127 = scmp.eq.s32.totalorder %s126, 0
      %s129 = sadd.s32 %s128, 1
      %s130 = scalar_select %p127, %s128, %s129
      %p133 = pneg %p127
      %p134 = scmp.eq.s32.totalorder %s17, 1
      %p135 = por %p133, %p134
      %p136 = scmp.ne.s32.totalorder %s128, %s131
      %p137 = scmp.eq.s32.totalorder %s17, 0
      %p138 = por %p136, %p137
      %p139 = scmp.ne.s32.totalorder %s128, %s131
      %p140 = scmp.eq.s32.totalorder %s22, 1
      %p141 = por %p139, %p140
      %p142 = scmp.ne.s32.totalorder %s131, %s132
      %p143 = scmp.eq.s32.totalorder %s22, 0
      %p144 = por %p142, %p143
      %p145 = scmp.ne.s32.totalorder %s131, %s132
      %p146 = scmp.eq.s32.totalorder %s23, 1
      %p147 = por %p145, %p146
      %p149 = scmp.ne.s32.totalorder %s132, %s148
      %p150 = scmp.eq.s32.totalorder %s23, 0
      %p151 = por %p149, %p150
      %s152 = ssub.s32 %s24, %s43
      %s153 = ssub.s32 %s25, %s39
      %s154 = sor.u32 %s152, %s153
      %p155 = scmp.eq.s32.totalorder %s154, 0
      %s157 = sadd.s32 %s156, 1
      %s158 = scalar_select %p155, %s156, %s157
      %p161 = pneg %p155
      %p162 = scmp.eq.s32.totalorder %s17, 1
      %p163 = por %p161, %p162
      %p164 = scmp.ne.s32.totalorder %s156, %s159
      %p165 = scmp.eq.s32.totalorder %s17, 0
      %p166 = por %p164, %p165
      %p167 = scmp.ne.s32.totalorder %s156, %s159
      %p168 = scmp.eq.s32.totalorder %s22, 1
      %p169 = por %p167, %p168
      %p170 = scmp.ne.s32.totalorder %s159, %s160
      %p171 = scmp.eq.s32.totalorder %s22, 0
      %p172 = por %p170, %p171
      %p173 = scmp.ne.s32.totalorder %s159, %s160
      %p174 = scmp.eq.s32.totalorder %s23, 1
      %p175 = por %p173, %p174
      %p177 = scmp.ne.s32.totalorder %s160, %s176
      %p178 = scmp.eq.s32.totalorder %s23, 0
      %p179 = por %p177, %p178
      %p180 = scmp.le.s32.totalorder 1, %s17
      %p181 = scmp.lt.s32.totalorder %s17, 3
      %p182 = pnand %p180, %p181
      %p183 = pneg %p182
      // Predicated region
      $region9: #{tpu_custom_call.1} parent=5 // pred_check
        _
      $region10: #{tpu_custom_call.1} parent=5 // pred_check_branch
        %185 = sbr.rel (%p182) target = $region12
      $region11: #{tpu_custom_call.1} parent=5 // pred_region
        %s186 = ssub.s32 %s17, 1
        // Predicated region
        $region13: #{tpu_custom_call.1} parent=11 // pred_check
          %p187 = pneg %p92
        $region14: #{tpu_custom_call.1} parent=11 // pred_check_branch
          %189 = sbr.rel (%p187) target = $region16
        $region15: #{tpu_custom_call.1} parent=11 // pred_region
          %s190 = smul.u32 16, %s29
          %s192 = ssub.s32 2048, 2048
          %193 = vsyncadd [#allocation7], %s192
          %s194 = sadd.s32 %s28, %s190
          %s195 = smul.addr %s194, 128
          %s196 = scalar_lea.hbm %s1, %s195
          %s197 = sshll.u32 [#allocation6], 4
          %s198 = int_to_ptr.vmem [resolvable:$true] %s197
          %203 = dma.hbm_to_vmem [thread:$0]  %s196, 2048, %s198, [#allocation7], 128, 128, 8
        $region16: #{tpu_custom_call.1} parent=11 // pred_fallthru
          _
        // Predicated region
        $region17: #{tpu_custom_call.1} parent=11 // pred_check
          %p204 = pneg %p118
        $region18: #{tpu_custom_call.1} parent=11 // pred_check_branch
          %206 = sbr.rel (%p204) target = $region20
        $region19: #{tpu_custom_call.1} parent=11 // pred_region
          %p207 = scmp.lt.s32.totalorder %s28, 0
          %s208 = scalar_select %p207, %s28, 0
          %s209 = scalar_lea.vmem %s2, %s208
        $region20: #{tpu_custom_call.1} parent=11 // pred_fallthru
          _
        // Predicated region
        $region21: #{tpu_custom_call.1} parent=11 // pred_check
          %p210 = pneg %p144
        $region22: #{tpu_custom_call.1} parent=11 // pred_check_branch
          %212 = sbr.rel (%p210) target = $region24
        $region23: #{tpu_custom_call.1} parent=11 // pred_region
          %p213 = scmp.lt.s32.totalorder %s28, 0
          %s214 = scalar_select %p213, %s28, 0
          %s215 = scalar_lea.vmem %s3, %s214
        $region24: #{tpu_custom_call.1} parent=11 // pred_fallthru
          _
      $region12: #{tpu_custom_call.1} parent=5 // pred_fallthru
        _
      %p216 = scmp.lt.s32.totalorder %s17, 2
      // Predicated region
      $region25: #{tpu_custom_call.1} parent=5 // pred_check
        %p217 = pneg %p216
      $region26: #{tpu_custom_call.1} parent=5 // pred_check_branch
        %219 = sbr.rel (%p217) target = $region28
      $region27: #{tpu_custom_call.1} parent=5 // pred_region
        // Predicated region
        $region29: #{tpu_custom_call.1} parent=27 // pred_check
          %p220 = pneg %p58
        $region30: #{tpu_custom_call.1} parent=27 // pred_check_branch
          %222 = sbr.rel (%p220) target = $region32
        $region31: #{tpu_custom_call.1} parent=27 // pred_region
          %s223 = sand.u32 %s48, 1
          %s224 = scalar_lea.sflag [#allocation4], %s223
          %s225 = sand.u32 %s48, 1
          %s226 = smul.addr %s225, 256
          %s227 = scalar_lea.vmem [#allocation3], %s226
          %s228 = smul.u32 32, %s24
          %s230 = ssub.s32 4096, 4096
          %231 = vsyncadd %s224, %s230
          %s232 = sadd.s32 %s26, %s228
          %s233 = smul.addr %s232, 128
          %s234 = scalar_lea.hbm %s0, %s233
          %s235 = sshll.u32 %s227, 4
          %s236 = int_to_ptr.vmem [resolvable:$true] %s235
          %241 = dma.hbm_to_vmem [thread:$0]  %s234, 4096, %s236, %s224, 128, 128, 8
        $region32: #{tpu_custom_call.1} parent=27 // pred_fallthru
          _
      $region28: #{tpu_custom_call.1} parent=5 // pred_fallthru
        _
      %p242 = scmp.le.s32.totalorder 1, %s17
      %p243 = scmp.lt.s32.totalorder %s17, 3
      %p244 = pnand %p242, %p243
      %p245 = pneg %p244
      // Predicated region
      $region33: #{tpu_custom_call.1} parent=5 // pred_check
        _
      $region34: #{tpu_custom_call.1} parent=5 // pred_check_branch
        %247 = sbr.rel (%p244) target = $region36
      $region35: #{tpu_custom_call.1} parent=5 // pred_region
        %s248 = ssub.s32 %s17, 1
        %s249 = sand.u32 %s51, 1
        %s250 = scalar_lea.sflag [#allocation4], %s249
        %s251 = sand.u32 %s51, 1
        %s252 = smul.addr %s251, 256
        %s253 = scalar_lea.vmem [#allocation3], %s252
        // Predicated region
        $region37: #{tpu_custom_call.1} parent=35 // pred_check
          %p254 = pneg %p64
        $region38: #{tpu_custom_call.1} parent=35 // pred_check_branch
          %256 = sbr.rel (%p254) target = $region40
        $region39: #{tpu_custom_call.1} parent=35 // pred_region
          %257 = dma.done %s250, 4096
        $region40: #{tpu_custom_call.1} parent=35 // pred_fallthru
          _
        // Predicated region
        $region41: #{tpu_custom_call.1} parent=35 // pred_check
          %p258 = pneg %p92
        $region42: #{tpu_custom_call.1} parent=35 // pred_check_branch
          %260 = sbr.rel (%p258) target = $region44
        $region43: #{tpu_custom_call.1} parent=35 // pred_region
          %261 = dma.done [#allocation7], 2048
        $region44: #{tpu_custom_call.1} parent=35 // pred_fallthru
          _
        %s262 = sand.u32 %s51, 1
        %s263 = scalar_lea.sflag [#allocation4], %s262
        %s264 = sand.u32 %s51, 1
        %s265 = smul.addr %s264, 256
        %s266 = scalar_lea.vmem [#allocation3], %s265
        %p267 = pneg %p64
        %p268 = pneg %p61
        %p269 = pneg %p92
        %p270 = pneg %p89
        %p271 = scmp.lt.s32.totalorder %s28, 0
        %s272 = scalar_select %p271, %s28, 0
        %s273 = scalar_lea.vmem %s2, %s272
        %p274 = pneg %p118
        %p275 = pneg %p115
        %p276 = scmp.lt.s32.totalorder %s28, 0
        %s277 = scalar_select %p276, %s28, 0
        %s278 = scalar_lea.vmem %s3, %s277
        %p279 = pneg %p144
        %p280 = pneg %p141
        %p281 = pneg %p172
        %p282 = pneg %p169
        %s283 = sand.u32 %s159, 1
        %s284 = scalar_lea.sflag [#allocation5], %s283
        %s285 = sand.u32 %s159, 1
        %s286 = smul.addr %s285, 256
        %s287 = scalar_lea.vmem [#allocation8], %s286
        %s288 = smul.u32 32, %s27
        %s289 = smul.u32 16, %s29
        %p290 = scmp.lt.s32.totalorder %s28, 0
        %s291 = scalar_select %p290, %s28, 0
        %s292 = scalar_lea.vmem %s2, %s291
        %p293 = scmp.lt.s32.totalorder %s28, 0
        %s294 = scalar_select %p293, %s28, 0
        %s295 = scalar_lea.vmem %s3, %s294
        %s296 = smul.u32 32, %s27
        %p297 = scmp.eq.s32.totalorder %s29, 0
        // Predicated region
        $region45: #{tpu_custom_call.1} parent=35 // pred_check
          %p298 = pneg %p297
        $region46: #{tpu_custom_call.1} parent=35 // pred_check_branch
          %300 = sbr.rel (%p298) target = $region48
        $region47: #{tpu_custom_call.1} parent=35 // pred_region
          %301 = vst [vmem:[#allocation2] sm:$0xff] 0.0
          %302 = vst [vmem:[#allocation2 + $0x8] sm:$0xff] 0.0
          %303 = vst [vmem:[#allocation2 + $0x10] sm:$0xff] 0.0
          %304 = vst [vmem:[#allocation2 + $0x18] sm:$0xff] 0.0
          %305 = vst [vmem:[#allocation2 + $0x20] sm:$0xff] 0.0
          %306 = vst [vmem:[#allocation2 + $0x28] sm:$0xff] 0.0
          %307 = vst [vmem:[#allocation2 + $0x30] sm:$0xff] 0.0
          %308 = vst [vmem:[#allocation2 + $0x38] sm:$0xff] 0.0
          %309 = vst [vmem:[#allocation2 + $0x40] sm:$0xff] 0.0
          %310 = vst [vmem:[#allocation2 + $0x48] sm:$0xff] 0.0
          %311 = vst [vmem:[#allocation2 + $0x50] sm:$0xff] 0.0
          %312 = vst [vmem:[#allocation2 + $0x58] sm:$0xff] 0.0
          %313 = vst [vmem:[#allocation2 + $0x60] sm:$0xff] 0.0
          %314 = vst [vmem:[#allocation2 + $0x68] sm:$0xff] 0.0
          %315 = vst [vmem:[#allocation2 + $0x70] sm:$0xff] 0.0
          %316 = vst [vmem:[#allocation2 + $0x78] sm:$0xff] 0.0
          %317 = vst [vmem:[#allocation2 + $0x80] sm:$0xff] 0.0
          %318 = vst [vmem:[#allocation2 + $0x88] sm:$0xff] 0.0
          %319 = vst [vmem:[#allocation2 + $0x90] sm:$0xff] 0.0
          %320 = vst [vmem:[#allocation2 + $0x98] sm:$0xff] 0.0
          %321 = vst [vmem:[#allocation2 + $0xa0] sm:$0xff] 0.0
          %322 = vst [vmem:[#allocation2 + $0xa8] sm:$0xff] 0.0
          %323 = vst [vmem:[#allocation2 + $0xb0] sm:$0xff] 0.0
          %324 = vst [vmem:[#allocation2 + $0xb8] sm:$0xff] 0.0
          %325 = vst [vmem:[#allocation2 + $0xc0] sm:$0xff] 0.0
          %326 = vst [vmem:[#allocation2 + $0xc8] sm:$0xff] 0.0
          %327 = vst [vmem:[#allocation2 + $0xd0] sm:$0xff] 0.0
          %328 = vst [vmem:[#allocation2 + $0xd8] sm:$0xff] 0.0
          %329 = vst [vmem:[#allocation2 + $0xe0] sm:$0xff] 0.0
          %330 = vst [vmem:[#allocation2 + $0xe8] sm:$0xff] 0.0
          %331 = vst [vmem:[#allocation2 + $0xf0] sm:$0xff] 0.0
          %332 = vst [vmem:[#allocation2 + $0xf8] sm:$0xff] 0.0
        $region48: #{tpu_custom_call.1} parent=35 // pred_fallthru
          _
        %v333 = vld [vmem:[#allocation2] sm:$0xff]
        %v334 = vld [vmem:[#allocation2 + $0x8] sm:$0xff]
        %v335 = vld [vmem:[#allocation2 + $0x10] sm:$0xff]
        %v336 = vld [vmem:[#allocation2 + $0x18] sm:$0xff]
        %v337 = vld [vmem:[#allocation2 + $0x20] sm:$0xff]
        %v338 = vld [vmem:[#allocation2 + $0x28] sm:$0xff]
        %v339 = vld [vmem:[#allocation2 + $0x30] sm:$0xff]
        %v340 = vld [vmem:[#allocation2 + $0x38] sm:$0xff]
        %v341 = vld [vmem:[#allocation2 + $0x40] sm:$0xff]
        %v342 = vld [vmem:[#allocation2 + $0x48] sm:$0xff]
        %v343 = vld [vmem:[#allocation2 + $0x50] sm:$0xff]
        %v344 = vld [vmem:[#allocation2 + $0x58] sm:$0xff]
        %v345 = vld [vmem:[#allocation2 + $0x60] sm:$0xff]
        %v346 = vld [vmem:[#allocation2 + $0x68] sm:$0xff]
        %v347 = vld [vmem:[#allocation2 + $0x70] sm:$0xff]
        %v348 = vld [vmem:[#allocation2 + $0x78] sm:$0xff]
        %v349 = vld [vmem:[#allocation2 + $0x80] sm:$0xff]
        %v350 = vld [vmem:[#allocation2 + $0x88] sm:$0xff]
        %v351 = vld [vmem:[#allocation2 + $0x90] sm:$0xff]
        %v352 = vld [vmem:[#allocation2 + $0x98] sm:$0xff]
        %v353 = vld [vmem:[#allocation2 + $0xa0] sm:$0xff]
        %v354 = vld [vmem:[#allocation2 + $0xa8] sm:$0xff]
        %v355 = vld [vmem:[#allocation2 + $0xb0] sm:$0xff]
        %v356 = vld [vmem:[#allocation2 + $0xb8] sm:$0xff]
        %v357 = vld [vmem:[#allocation2 + $0xc0] sm:$0xff]
        %v358 = vld [vmem:[#allocation2 + $0xc8] sm:$0xff]
        %v359 = vld [vmem:[#allocation2 + $0xd0] sm:$0xff]
        %v360 = vld [vmem:[#allocation2 + $0xd8] sm:$0xff]
        %v361 = vld [vmem:[#allocation2 + $0xe0] sm:$0xff]
        %v362 = vld [vmem:[#allocation2 + $0xe8] sm:$0xff]
        %v363 = vld [vmem:[#allocation2 + $0xf0] sm:$0xff]
        %v364 = vld [vmem:[#allocation2 + $0xf8] sm:$0xff]
        %v365 = vld [vmem:[%s253] sm:$0xff]
        %v366 = vld [vmem:[%s253 + $0x8] sm:$0xff]
        %v367 = vld [vmem:[%s253 + $0x10] sm:$0xff]
        %v368 = vld [vmem:[%s253 + $0x18] sm:$0xff]
        %v369 = vld [vmem:[%s253 + $0x20] sm:$0xff]
        %v370 = vld [vmem:[%s253 + $0x28] sm:$0xff]
        %v371 = vld [vmem:[%s253 + $0x30] sm:$0xff]
        %v372 = vld [vmem:[%s253 + $0x38] sm:$0xff]
        %v373 = vld [vmem:[%s253 + $0x40] sm:$0xff]
        %v374 = vld [vmem:[%s253 + $0x48] sm:$0xff]
        %v375 = vld [vmem:[%s253 + $0x50] sm:$0xff]
        %v376 = vld [vmem:[%s253 + $0x58] sm:$0xff]
        %v377 = vld [vmem:[%s253 + $0x60] sm:$0xff]
        %v378 = vld [vmem:[%s253 + $0x68] sm:$0xff]
        %v379 = vld [vmem:[%s253 + $0x70] sm:$0xff]
        %v380 = vld [vmem:[%s253 + $0x78] sm:$0xff]
        %v381 = vld [vmem:[%s253 + $0x80] sm:$0xff]
        %v382 = vld [vmem:[%s253 + $0x88] sm:$0xff]
        %v383 = vld [vmem:[%s253 + $0x90] sm:$0xff]
        %v384 = vld [vmem:[%s253 + $0x98] sm:$0xff]
        %v385 = vld [vmem:[%s253 + $0xa0] sm:$0xff]
        %v386 = vld [vmem:[%s253 + $0xa8] sm:$0xff]
        %v387 = vld [vmem:[%s253 + $0xb0] sm:$0xff]
        %v388 = vld [vmem:[%s253 + $0xb8] sm:$0xff]
        %v389 = vld [vmem:[%s253 + $0xc0] sm:$0xff]
        %v390 = vld [vmem:[%s253 + $0xc8] sm:$0xff]
        %v391 = vld [vmem:[%s253 + $0xd0] sm:$0xff]
        %v392 = vld [vmem:[%s253 + $0xd8] sm:$0xff]
        %v393 = vld [vmem:[%s253 + $0xe0] sm:$0xff]
        %v394 = vld [vmem:[%s253 + $0xe8] sm:$0xff]
        %v395 = vld [vmem:[%s253 + $0xf0] sm:$0xff]
        %v396 = vld [vmem:[%s253 + $0xf8] sm:$0xff]
        %v397 = vld [vmem:[#allocation6] sm:$0xff]
        %v398 = vld [vmem:[#allocation6 + $0x8] sm:$0xff]
        %v399 = vld [vmem:[#allocation6 + $0x10] sm:$0xff]
        %v400 = vld [vmem:[#allocation6 + $0x18] sm:$0xff]
        %v401 = vld [vmem:[#allocation6 + $0x20] sm:$0xff]
        %v402 = vld [vmem:[#allocation6 + $0x28] sm:$0xff]
        %v403 = vld [vmem:[#allocation6 + $0x30] sm:$0xff]
        %v404 = vld [vmem:[#allocation6 + $0x38] sm:$0xff]
        %v405 = vld [vmem:[#allocation6 + $0x40] sm:$0xff]
        %v406 = vld [vmem:[#allocation6 + $0x48] sm:$0xff]
        %v407 = vld [vmem:[#allocation6 + $0x50] sm:$0xff]
        %v408 = vld [vmem:[#allocation6 + $0x58] sm:$0xff]
        %v409 = vld [vmem:[#allocation6 + $0x60] sm:$0xff]
        %v410 = vld [vmem:[#allocation6 + $0x68] sm:$0xff]
        %v411 = vld [vmem:[#allocation6 + $0x70] sm:$0xff]
        %v412 = vld [vmem:[#allocation6 + $0x78] sm:$0xff]
        %413 = vmatprep.subr.mxu0 0.0
        %414 = vmatpush1.msra.mxu0 %v397
        %415 = vmatprep.subr.mxu0 0.0
        %416 = vmatpush1.msra.mxu0 %v398
        %417 = vmatprep.subr.mxu0 0.0
        %418 = vmatpush1.msra.mxu0 %v399
        %419 = vmatprep.subr.mxu0 0.0
        %420 = vmatpush1.msra.mxu0 %v400
        %421 = vmatprep.subr.mxu0 0.0
        %422 = vmatpush1.msra.mxu0 %v401
        %423 = vmatprep.subr.mxu0 0.0
        %424 = vmatpush1.msra.mxu0 %v402
        %425 = vmatprep.subr.mxu0 0.0
        %426 = vmatpush1.msra.mxu0 %v403
        %427 = vmatprep.subr.mxu0 0.0
        %428 = vmatpush1.msra.mxu0 %v404
        %429 = vmatprep.subr.mxu0 0.0
        %430 = vmatpush1.msra.mxu0 %v405
        %431 = vmatprep.subr.mxu0 0.0
        %432 = vmatpush1.msra.mxu0 %v406
        %433 = vmatprep.subr.mxu0 0.0
        %434 = vmatpush1.msra.mxu0 %v407
        %435 = vmatprep.subr.mxu0 0.0
        %436 = vmatpush1.msra.mxu0 %v408
        %437 = vmatprep.subr.mxu0 0.0
        %438 = vmatpush1.msra.mxu0 %v409
        %439 = vmatprep.subr.mxu0 0.0
        %440 = vmatpush1.msra.mxu0 %v410
        %441 = vmatprep.subr.mxu0 0.0
        %442 = vmatpush1.msra.mxu0 %v411
        %443 = vmatprep.subr.mxu0 0.0
        %444 = vmatpush1.msra.mxu0 %v412
        %445 = vmatprep.subr.mxu0 0.0
        %446 = vmatpush1.msra.mxu0 0.0
        %447 = vmatprep.subr.mxu0 0.0
        %448 = vmatpush1.msra.mxu0 0.0
        %449 = vmatprep.subr.mxu0 0.0
        %450 = vmatpush1.msra.mxu0 0.0
        %451 = vmatprep.subr.mxu0 0.0
        %452 = vmatpush1.msra.mxu0 0.0
        %453 = vmatprep.subr.mxu0 0.0
        %454 = vmatpush1.msra.mxu0 0.0
        %455 = vmatprep.subr.mxu0 0.0
        %456 = vmatpush1.msra.mxu0 0.0
        %457 = vmatprep.subr.mxu0 0.0
        %458 = vmatpush1.msra.mxu0 0.0
        %459 = vmatprep.subr.mxu0 0.0
        %460 = vmatpush1.msra.mxu0 0.0
        %461 = vmatprep.subr.mxu0 0.0
        %462 = vmatpush1.msra.mxu0 0.0
        %463 = vmatprep.subr.mxu0 0.0
        %464 = vmatpush1.msra.mxu0 0.0
        %465 = vmatprep.subr.mxu0 0.0
        %466 = vmatpush1.msra.mxu0 0.0
        %467 = vmatprep.subr.mxu0 0.0
        %468 = vmatpush1.msra.mxu0 0.0
        %469 = vmatprep.subr.mxu0 0.0
        %470 = vmatpush1.msra.mxu0 0.0
        %471 = vmatprep.subr.mxu0 0.0
        %472 = vmatpush1.msra.mxu0 0.0
        %473 = vmatprep.subr.mxu0 0.0
        %474 = vmatpush1.msra.mxu0 0.0
        %475 = vmatprep.subr.mxu0 0.0
        %476 = vmatpush1.msra.mxu0 0.0
        %477 = vmatprep.mubr.f32.mxu0 0.0
        %478 = vmatmul.mubr.f32.gmra.mrb[0].mxu0 %v365
        %v479 = vpop.f32.mrb[0].mxu0
        %v480 = vadd.f32 0.0, %v479
        %v481 = vpop.f32.mrb[0].mxu0
        %482 = vmatprep.mubr.f32.mxu0 0.0
        %483 = vmatmul.mubr.f32.gmra.mrb[0].mxu0 %v366
        %v484 = vpop.f32.mrb[0].mxu0
        %v485 = vadd.f32 0.0, %v484
        %v486 = vpop.f32.mrb[0].mxu0
        %487 = vmatprep.mubr.f32.mxu0 0.0
        %488 = vmatmul.mubr.f32.gmra.mrb[0].mxu0 %v367
        %v489 = vpop.f32.mrb[0].mxu0
        %v490 = vadd.f32 0.0, %v489
        %v491 = vpop.f32.mrb[0].mxu0
        %492 = vmatprep.mubr.f32.mxu0 0.0
        %493 = vmatmul.mubr.f32.gmra.mrb[0].mxu0 %v368
        %v494 = vpop.f32.mrb[0].mxu0
        %v495 = vadd.f32 0.0, %v494
        %v496 = vpop.f32.mrb[0].mxu0
        %497 = vmatprep.mubr.f32.mxu0 0.0
        %498 = vmatmul.mubr.f32.gmra.mrb[0].mxu0 %v369
        %v499 = vpop.f32.mrb[0].mxu0
        %v500 = vadd.f32 0.0, %v499
        %v501 = vpop.f32.mrb[0].mxu0
        %502 = vmatprep.mubr.f32.mxu0 0.0
        %503 = vmatmul.mubr.f32.gmra.mrb[0].mxu0 %v370
        %v504 = vpop.f32.mrb[0].mxu0
        %v505 = vadd.f32 0.0, %v504
        %v506 = vpop.f32.mrb[0].mxu0
        %507 = vmatprep.mubr.f32.mxu0 0.0
        %508 = vmatmul.mubr.f32.gmra.mrb[0].mxu0 %v371
        %v509 = vpop.f32.mrb[0].mxu0
        %v510 = vadd.f32 0.0, %v509
        %v511 = vpop.f32.mrb[0].mxu0
        %512 = vmatprep.mubr.f32.mxu0 0.0
        %513 = vmatmul.mubr.f32.gmra.mrb[0].mxu0 %v372
        %v514 = vpop.f32.mrb[0].mxu0
        %v515 = vadd.f32 0.0, %v514
        %v516 = vpop.f32.mrb[0].mxu0
        %517 = vmatprep.mubr.f32.mxu0 0.0
        %518 = vmatmul.mubr.f32.gmra.mrb[0].mxu0 %v373
        %v519 = vpop.f32.mrb[0].mxu0
        %v520 = vadd.f32 0.0, %v519
        %v521 = vpop.f32.mrb[0].mxu0
        %522 = vmatprep.mubr.f32.mxu0 0.0
        %523 = vmatmul.mubr.f32.gmra.mrb[0].mxu0 %v374
        %v524 = vpop.f32.mrb[0].mxu0
        %v525 = vadd.f32 0.0, %v524
        %v526 = vpop.f32.mrb[0].mxu0
        %527 = vmatprep.mubr.f32.mxu0 0.0
        %528 = vmatmul.mubr.f32.gmra.mrb[0].mxu0 %v375
        %v529 = vpop.f32.mrb[0].mxu0
        %v530 = vadd.f32 0.0, %v529
        %v531 = vpop.f32.mrb[0].mxu0
        %532 = vmatprep.mubr.f32.mxu0 0.0
        %533 = vmatmul.mubr.f32.gmra.mrb[0].mxu0 %v376
        %v534 = vpop.f32.mrb[0].mxu0
        %v535 = vadd.f32 0.0, %v534
        %v536 = vpop.f32.mrb[0].mxu0
        %537 = vmatprep.mubr.f32.mxu0 0.0
        %538 = vmatmul.mubr.f32.gmra.mrb[0].mxu0 %v377
        %v539 = vpop.f32.mrb[0].mxu0
        %v540 = vadd.f32 0.0, %v539
        %v541 = vpop.f32.mrb[0].mxu0
        %542 = vmatprep.mubr.f32.mxu0 0.0
        %543 = vmatmul.mubr.f32.gmra.mrb[0].mxu0 %v378
        %v544 = vpop.f32.mrb[0].mxu0
        %v545 = vadd.f32 0.0, %v544
        %v546 = vpop.f32.mrb[0].mxu0
        %547 = vmatprep.mubr.f32.mxu0 0.0
        %548 = vmatmul.mubr.f32.gmra.mrb[0].mxu0 %v379
        %v549 = vpop.f32.mrb[0].mxu0
        %v550 = vadd.f32 0.0, %v549
        %v551 = vpop.f32.mrb[0].mxu0
        %552 = vmatprep.mubr.f32.mxu0 0.0
        %553 = vmatmul.mubr.f32.gmra.mrb[0].mxu0 %v380
        %v554 = vpop.f32.mrb[0].mxu0
        %v555 = vadd.f32 0.0, %v554
        %v556 = vpop.f32.mrb[0].mxu0
        %557 = vmatprep.mubr.f32.mxu0 0.0
        %558 = vmatmul.mubr.f32.gmra.mrb[0].mxu0 %v381
        %v559 = vpop.f32.mrb[0].mxu0
        %v560 = vadd.f32 0.0, %v559
        %v561 = vpop.f32.mrb[0].mxu0
        %562 = vmatprep.mubr.f32.mxu0 0.0
        %563 = vmatmul.mubr.f32.gmra.mrb[0].mxu0 %v382
        %v564 = vpop.f32.mrb[0].mxu0
        %v565 = vadd.f32 0.0, %v564
        %v566 = vpop.f32.mrb[0].mxu0
        %567 = vmatprep.mubr.f32.mxu0 0.0
        %568 = vmatmul.mubr.f32.gmra.mrb[0].mxu0 %v383
        %v569 = vpop.f32.mrb[0].mxu0
        %v570 = vadd.f32 0.0, %v569
        %v571 = vpop.f32.mrb[0].mxu0
        %572 = vmatprep.mubr.f32.mxu0 0.0
        %573 = vmatmul.mubr.f32.gmra.mrb[0].mxu0 %v384
        %v574 = vpop.f32.mrb[0].mxu0
        %v575 = vadd.f32 0.0, %v574
        %v576 = vpop.f32.mrb[0].mxu0
        %577 = vmatprep.mubr.f32.mxu0 0.0
        %578 = vmatmul.mubr.f32.gmra.mrb[0].mxu0 %v385
        %v579 = vpop.f32.mrb[0].mxu0
        %v580 = vadd.f32 0.0, %v579
        %v581 = vpop.f32.mrb[0].mxu0
        %582 = vmatprep.mubr.f32.mxu0 0.0
        %583 = vmatmul.mubr.f32.gmra.mrb[0].mxu0 %v386
        %v584 = vpop.f32.mrb[0].mxu0
        %v585 = vadd.f32 0.0, %v584
        %v586 = vpop.f32.mrb[0].mxu0
        %587 = vmatprep.mubr.f32.mxu0 0.0
        %588 = vmatmul.mubr.f32.gmra.mrb[0].mxu0 %v387
        %v589 = vpop.f32.mrb[0].mxu0
        %v590 = vadd.f32 0.0, %v589
        %v591 = vpop.f32.mrb[0].mxu0
        %592 = vmatprep.mubr.f32.mxu0 0.0
        %593 = vmatmul.mubr.f32.gmra.mrb[0].mxu0 %v388
        %v594 = vpop.f32.mrb[0].mxu0
        %v595 = vadd.f32 0.0, %v594
        %v596 = vpop.f32.mrb[0].mxu0
        %597 = vmatprep.mubr.f32.mxu0 0.0
        %598 = vmatmul.mubr.f32.gmra.mrb[0].mxu0 %v389
        %v599 = vpop.f32.mrb[0].mxu0
        %v600 = vadd.f32 0.0, %v599
        %v601 = vpop.f32.mrb[0].mxu0
        %602 = vmatprep.mubr.f32.mxu0 0.0
        %603 = vmatmul.mubr.f32.gmra.mrb[0].mxu0 %v390
        %v604 = vpop.f32.mrb[0].mxu0
        %v605 = vadd.f32 0.0, %v604
        %v606 = vpop.f32.mrb[0].mxu0
        %607 = vmatprep.mubr.f32.mxu0 0.0
        %608 = vmatmul.mubr.f32.gmra.mrb[0].mxu0 %v391
        %v609 = vpop.f32.mrb[0].mxu0
        %v610 = vadd.f32 0.0, %v609
        %v611 = vpop.f32.mrb[0].mxu0
        %612 = vmatprep.mubr.f32.mxu0 0.0
        %613 = vmatmul.mubr.f32.gmra.mrb[0].mxu0 %v392
        %v614 = vpop.f32.mrb[0].mxu0
        %v615 = vadd.f32 0.0, %v614
        %v616 = vpop.f32.mrb[0].mxu0
        %617 = vmatprep.mubr.f32.mxu0 0.0
        %618 = vmatmul.mubr.f32.gmra.mrb[0].mxu0 %v393
        %v619 = vpop.f32.mrb[0].mxu0
        %v620 = vadd.f32 0.0, %v619
        %v621 = vpop.f32.mrb[0].mxu0
        %622 = vmatprep.mubr.f32.mxu0 0.0
        %623 = vmatmul.mubr.f32.gmra.mrb[0].mxu0 %v394
        %v624 = vpop.f32.mrb[0].mxu0
        %v625 = vadd.f32 0.0, %v624
        %v626 = vpop.f32.mrb[0].mxu0
        %627 = vmatprep.mubr.f32.mxu0 0.0
        %628 = vmatmul.mubr.f32.gmra.mrb[0].mxu0 %v395
        %v629 = vpop.f32.mrb[0].mxu0
        %v630 = vadd.f32 0.0, %v629
        %v631 = vpop.f32.mrb[0].mxu0
        %632 = vmatprep.mubr.f32.mxu0 0.0
        %633 = vmatmul.mubr.f32.gmra.mrb[0].mxu0 %v396
        %v634 = vpop.f32.mrb[0].mxu0
        %v635 = vadd.f32 0.0, %v634
        %v636 = vpop.f32.mrb[0].mxu0
        %637 = vdwg.mxu0
        %v638 = vadd.f32 %v333, %v480
        %v639 = vadd.f32 %v334, %v485
        %v640 = vadd.f32 %v335, %v490
        %v641 = vadd.f32 %v336, %v495
        %v642 = vadd.f32 %v337, %v500
        %v643 = vadd.f32 %v338, %v505
        %v644 = vadd.f32 %v339, %v510
        %v645 = vadd.f32 %v340, %v515
        %v646 = vadd.f32 %v341, %v520
        %v647 = vadd.f32 %v342, %v525
        %v648 = vadd.f32 %v343, %v530
        %v649 = vadd.f32 %v344, %v535
        %v650 = vadd.f32 %v345, %v540
        %v651 = vadd.f32 %v346, %v545
        %v652 = vadd.f32 %v347, %v550
        %v653 = vadd.f32 %v348, %v555
        %v654 = vadd.f32 %v349, %v560
        %v655 = vadd.f32 %v350, %v565
        %v656 = vadd.f32 %v351, %v570
        %v657 = vadd.f32 %v352, %v575
        %v658 = vadd.f32 %v353, %v580
        %v659 = vadd.f32 %v354, %v585
        %v660 = vadd.f32 %v355, %v590
        %v661 = vadd.f32 %v356, %v595
        %v662 = vadd.f32 %v357, %v600
        %v663 = vadd.f32 %v358, %v605
        %v664 = vadd.f32 %v359, %v610
        %v665 = vadd.f32 %v360, %v615
        %v666 = vadd.f32 %v361, %v620
        %v667 = vadd.f32 %v362, %v625
        %v668 = vadd.f32 %v363, %v630
        %v669 = vadd.f32 %v364, %v635
        %670 = vst [vmem:[#allocation2] sm:$0xff] %v638
        %671 = vst [vmem:[#allocation2 + $0x8] sm:$0xff] %v639
        %672 = vst [vmem:[#allocation2 + $0x10] sm:$0xff] %v640
        %673 = vst [vmem:[#allocation2 + $0x18] sm:$0xff] %v641
        %674 = vst [vmem:[#allocation2 + $0x20] sm:$0xff] %v642
        %675 = vst [vmem:[#allocation2 + $0x28] sm:$0xff] %v643
        %676 = vst [vmem:[#allocation2 + $0x30] sm:$0xff] %v644
        %677 = vst [vmem:[#allocation2 + $0x38] sm:$0xff] %v645
        %678 = vst [vmem:[#allocation2 + $0x40] sm:$0xff] %v646
        %679 = vst [vmem:[#allocation2 + $0x48] sm:$0xff] %v647
        %680 = vst [vmem:[#allocation2 + $0x50] sm:$0xff] %v648
        %681 = vst [vmem:[#allocation2 + $0x58] sm:$0xff] %v649
        %682 = vst [vmem:[#allocation2 + $0x60] sm:$0xff] %v650
        %683 = vst [vmem:[#allocation2 + $0x68] sm:$0xff] %v651
        %684 = vst [vmem:[#allocation2 + $0x70] sm:$0xff] %v652
        %685 = vst [vmem:[#allocation2 + $0x78] sm:$0xff] %v653
        %686 = vst [vmem:[#allocation2 + $0x80] sm:$0xff] %v654
        %687 = vst [vmem:[#allocation2 + $0x88] sm:$0xff] %v655
        %688 = vst [vmem:[#allocation2 + $0x90] sm:$0xff] %v656
        %689 = vst [vmem:[#allocation2 + $0x98] sm:$0xff] %v657
        %690 = vst [vmem:[#allocation2 + $0xa0] sm:$0xff] %v658
        %691 = vst [vmem:[#allocation2 + $0xa8] sm:$0xff] %v659
        %692 = vst [vmem:[#allocation2 + $0xb0] sm:$0xff] %v660
        %693 = vst [vmem:[#allocation2 + $0xb8] sm:$0xff] %v661
        %694 = vst [vmem:[#allocation2 + $0xc0] sm:$0xff] %v662
        %695 = vst [vmem:[#allocation2 + $0xc8] sm:$0xff] %v663
        %696 = vst [vmem:[#allocation2 + $0xd0] sm:$0xff] %v664
        %697 = vst [vmem:[#allocation2 + $0xd8] sm:$0xff] %v665
        %698 = vst [vmem:[#allocation2 + $0xe0] sm:$0xff] %v666
        %699 = vst [vmem:[#allocation2 + $0xe8] sm:$0xff] %v667
        %700 = vst [vmem:[#allocation2 + $0xf0] sm:$0xff] %v668
        %701 = vst [vmem:[#allocation2 + $0xf8] sm:$0xff] %v669
        // Predicated region
        $region49: #{tpu_custom_call.1} parent=35 // pred_check
          %p702 = pneg %p297
        $region50: #{tpu_custom_call.1} parent=35 // pred_check_branch
          %704 = sbr.rel (%p702) target = $region52
        $region51: #{tpu_custom_call.1} parent=35 // pred_region
          %v705 = vld [vmem:[#allocation2] sm:$0xff]
          %v706 = vld [vmem:[#allocation2 + $0x8] sm:$0xff]
          %v707 = vld [vmem:[#allocation2 + $0x10] sm:$0xff]
          %v708 = vld [vmem:[#allocation2 + $0x18] sm:$0xff]
          %v709 = vld [vmem:[#allocation2 + $0x20] sm:$0xff]
          %v710 = vld [vmem:[#allocation2 + $0x28] sm:$0xff]
          %v711 = vld [vmem:[#allocation2 + $0x30] sm:$0xff]
          %v712 = vld [vmem:[#allocation2 + $0x38] sm:$0xff]
          %v713 = vld [vmem:[#allocation2 + $0x40] sm:$0xff]
          %v714 = vld [vmem:[#allocation2 + $0x48] sm:$0xff]
          %v715 = vld [vmem:[#allocation2 + $0x50] sm:$0xff]
          %v716 = vld [vmem:[#allocation2 + $0x58] sm:$0xff]
          %v717 = vld [vmem:[#allocation2 + $0x60] sm:$0xff]
          %v718 = vld [vmem:[#allocation2 + $0x68] sm:$0xff]
          %v719 = vld [vmem:[#allocation2 + $0x70] sm:$0xff]
          %v720 = vld [vmem:[#allocation2 + $0x78] sm:$0xff]
          %v721 = vld [vmem:[#allocation2 + $0x80] sm:$0xff]
          %v722 = vld [vmem:[#allocation2 + $0x88] sm:$0xff]
          %v723 = vld [vmem:[#allocation2 + $0x90] sm:$0xff]
          %v724 = vld [vmem:[#allocation2 + $0x98] sm:$0xff]
          %v725 = vld [vmem:[#allocation2 + $0xa0] sm:$0xff]
          %v726 = vld [vmem:[#allocation2 + $0xa8] sm:$0xff]
          %v727 = vld [vmem:[#allocation2 + $0xb0] sm:$0xff]
          %v728 = vld [vmem:[#allocation2 + $0xb8] sm:$0xff]
          %v729 = vld [vmem:[#allocation2 + $0xc0] sm:$0xff]
          %v730 = vld [vmem:[#allocation2 + $0xc8] sm:$0xff]
          %v731 = vld [vmem:[#allocation2 + $0xd0] sm:$0xff]
          %v732 = vld [vmem:[#allocation2 + $0xd8] sm:$0xff]
          %v733 = vld [vmem:[#allocation2 + $0xe0] sm:$0xff]
          %v734 = vld [vmem:[#allocation2 + $0xe8] sm:$0xff]
          %v735 = vld [vmem:[#allocation2 + $0xf0] sm:$0xff]
          %v736 = vld [vmem:[#allocation2 + $0xf8] sm:$0xff]
          %v737 = vld [vmem:[%s292] sm:$0x1]
          %v739 = vlaneseq
          %v740 = vshrl.u32 %v739, 7
          %v741 = vsub.s32 0, %v740
          %v742 = vrot.slane %v737, %v741
          %v744 = vmul.f32 %v705, %v742
          %v745 = vmul.f32 %v706, %v742
          %v746 = vmul.f32 %v707, %v742
          %v747 = vmul.f32 %v708, %v742
          %v748 = vmul.f32 %v709, %v742
          %v749 = vmul.f32 %v710, %v742
          %v750 = vmul.f32 %v711, %v742
          %v751 = vmul.f32 %v712, %v742
          %v752 = vmul.f32 %v713, %v742
          %v753 = vmul.f32 %v714, %v742
          %v754 = vmul.f32 %v715, %v742
          %v755 = vmul.f32 %v716, %v742
          %v756 = vmul.f32 %v717, %v742
          %v757 = vmul.f32 %v718, %v742
          %v758 = vmul.f32 %v719, %v742
          %v759 = vmul.f32 %v720, %v742
          %v760 = vmul.f32 %v721, %v742
          %v761 = vmul.f32 %v722, %v742
          %v762 = vmul.f32 %v723, %v742
          %v763 = vmul.f32 %v724, %v742
          %v764 = vmul.f32 %v725, %v742
          %v765 = vmul.f32 %v726, %v742
          %v766 = vmul.f32 %v727, %v742
          %v767 = vmul.f32 %v728, %v742
          %v768 = vmul.f32 %v729, %v742
          %v769 = vmul.f32 %v730, %v742
          %v770 = vmul.f32 %v731, %v742
          %v771 = vmul.f32 %v732, %v742
          %v772 = vmul.f32 %v733, %v742
          %v773 = vmul.f32 %v734, %v742
          %v774 = vmul.f32 %v735, %v742
          %v775 = vmul.f32 %v736, %v742
          %v776 = vld [vmem:[%s295] sm:$0x1]
          %v778 = vlaneseq
          %v779 = vshrl.u32 %v778, 7
          %v780 = vsub.s32 0, %v779
          %v781 = vrot.slane %v776, %v780
          %v783 = vadd.f32 %v744, %v781
          %v784 = vadd.f32 %v745, %v781
          %v785 = vadd.f32 %v746, %v781
          %v786 = vadd.f32 %v747, %v781
          %v787 = vadd.f32 %v748, %v781
          %v788 = vadd.f32 %v749, %v781
          %v789 = vadd.f32 %v750, %v781
          %v790 = vadd.f32 %v751, %v781
          %v791 = vadd.f32 %v752, %v781
          %v792 = vadd.f32 %v753, %v781
          %v793 = vadd.f32 %v754, %v781
          %v794 = vadd.f32 %v755, %v781
          %v795 = vadd.f32 %v756, %v781
          %v796 = vadd.f32 %v757, %v781
          %v797 = vadd.f32 %v758, %v781
          %v798 = vadd.f32 %v759, %v781
          %v799 = vadd.f32 %v760, %v781
          %v800 = vadd.f32 %v761, %v781
          %v801 = vadd.f32 %v762, %v781
          %v802 = vadd.f32 %v763, %v781
          %v803 = vadd.f32 %v764, %v781
          %v804 = vadd.f32 %v765, %v781
          %v805 = vadd.f32 %v766, %v781
          %v806 = vadd.f32 %v767, %v781
          %v807 = vadd.f32 %v768, %v781
          %v808 = vadd.f32 %v769, %v781
          %v809 = vadd.f32 %v770, %v781
          %v810 = vadd.f32 %v771, %v781
          %v811 = vadd.f32 %v772, %v781
          %v812 = vadd.f32 %v773, %v781
          %v813 = vadd.f32 %v774, %v781
          %v814 = vadd.f32 %v775, %v781
          %v815 = vxor.u32 %v783, 2147483648
          %v816 = vxor.u32 %v784, 2147483648
          %v817 = vxor.u32 %v785, 2147483648
          %v818 = vxor.u32 %v786, 2147483648
          %v819 = vxor.u32 %v787, 2147483648
          %v820 = vxor.u32 %v788, 2147483648
          %v821 = vxor.u32 %v789, 2147483648
          %v822 = vxor.u32 %v790, 2147483648
          %v823 = vxor.u32 %v791, 2147483648
          %v824 = vxor.u32 %v792, 2147483648
          %v825 = vxor.u32 %v793, 2147483648
          %v826 = vxor.u32 %v794, 2147483648
          %v827 = vxor.u32 %v795, 2147483648
          %v828 = vxor.u32 %v796, 2147483648
          %v829 = vxor.u32 %v797, 2147483648
          %v830 = vxor.u32 %v798, 2147483648
          %v831 = vxor.u32 %v799, 2147483648
          %v832 = vxor.u32 %v800, 2147483648
          %v833 = vxor.u32 %v801, 2147483648
          %v834 = vxor.u32 %v802, 2147483648
          %v835 = vxor.u32 %v803, 2147483648
          %v836 = vxor.u32 %v804, 2147483648
          %v837 = vxor.u32 %v805, 2147483648
          %v838 = vxor.u32 %v806, 2147483648
          %v839 = vxor.u32 %v807, 2147483648
          %v840 = vxor.u32 %v808, 2147483648
          %v841 = vxor.u32 %v809, 2147483648
          %v842 = vxor.u32 %v810, 2147483648
          %v843 = vxor.u32 %v811, 2147483648
          %v844 = vxor.u32 %v812, 2147483648
          %v845 = vxor.u32 %v813, 2147483648
          %v846 = vxor.u32 %v814, 2147483648
          %v847 = vmul.f32 %v815, 1.442695
          %v848 = vpow.pop %v847
          %v849 = vmul.f32 %v816, 1.442695
          %v850 = vpow.pop %v849
          %v851 = vmul.f32 %v817, 1.442695
          %v852 = vpow.pop %v851
          %v853 = vmul.f32 %v818, 1.442695
          %v854 = vpow.pop %v853
          %v855 = vmul.f32 %v819, 1.442695
          %v856 = vpow.pop %v855
          %v857 = vmul.f32 %v820, 1.442695
          %v858 = vpow.pop %v857
          %v859 = vmul.f32 %v821, 1.442695
          %v860 = vpow.pop %v859
          %v861 = vmul.f32 %v822, 1.442695
          %v862 = vpow.pop %v861
          %v863 = vmul.f32 %v823, 1.442695
          %v864 = vpow.pop %v863
          %v865 = vmul.f32 %v824, 1.442695
          %v866 = vpow.pop %v865
          %v867 = vmul.f32 %v825, 1.442695
          %v868 = vpow.pop %v867
          %v869 = vmul.f32 %v826, 1.442695
          %v870 = vpow.pop %v869
          %v871 = vmul.f32 %v827, 1.442695
          %v872 = vpow.pop %v871
          %v873 = vmul.f32 %v828, 1.442695
          %v874 = vpow.pop %v873
          %v875 = vmul.f32 %v829, 1.442695
          %v876 = vpow.pop %v875
          %v877 = vmul.f32 %v830, 1.442695
          %v878 = vpow.pop %v877
          %v879 = vmul.f32 %v831, 1.442695
          %v880 = vpow.pop %v879
          %v881 = vmul.f32 %v832, 1.442695
          %v882 = vpow.pop %v881
          %v883 = vmul.f32 %v833, 1.442695
          %v884 = vpow.pop %v883
          %v885 = vmul.f32 %v834, 1.442695
          %v886 = vpow.pop %v885
          %v887 = vmul.f32 %v835, 1.442695
          %v888 = vpow.pop %v887
          %v889 = vmul.f32 %v836, 1.442695
          %v890 = vpow.pop %v889
          %v891 = vmul.f32 %v837, 1.442695
          %v892 = vpow.pop %v891
          %v893 = vmul.f32 %v838, 1.442695
          %v894 = vpow.pop %v893
          %v895 = vmul.f32 %v839, 1.442695
          %v896 = vpow.pop %v895
          %v897 = vmul.f32 %v840, 1.442695
          %v898 = vpow.pop %v897
          %v899 = vmul.f32 %v841, 1.442695
          %v900 = vpow.pop %v899
          %v901 = vmul.f32 %v842, 1.442695
          %v902 = vpow.pop %v901
          %v903 = vmul.f32 %v843, 1.442695
          %v904 = vpow.pop %v903
          %v905 = vmul.f32 %v844, 1.442695
          %v906 = vpow.pop %v905
          %v907 = vmul.f32 %v845, 1.442695
          %v908 = vpow.pop %v907
          %v909 = vmul.f32 %v846, 1.442695
          %v910 = vpow.pop %v909
          %v911 = vadd.f32 %v848, 1.0
          %v912 = vadd.f32 %v850, 1.0
          %v913 = vadd.f32 %v852, 1.0
          %v914 = vadd.f32 %v854, 1.0
          %v915 = vadd.f32 %v856, 1.0
          %v916 = vadd.f32 %v858, 1.0
          %v917 = vadd.f32 %v860, 1.0
          %v918 = vadd.f32 %v862, 1.0
          %v919 = vadd.f32 %v864, 1.0
          %v920 = vadd.f32 %v866, 1.0
          %v921 = vadd.f32 %v868, 1.0
          %v922 = vadd.f32 %v870, 1.0
          %v923 = vadd.f32 %v872, 1.0
          %v924 = vadd.f32 %v874, 1.0
          %v925 = vadd.f32 %v876, 1.0
          %v926 = vadd.f32 %v878, 1.0
          %v927 = vadd.f32 %v880, 1.0
          %v928 = vadd.f32 %v882, 1.0
          %v929 = vadd.f32 %v884, 1.0
          %v930 = vadd.f32 %v886, 1.0
          %v931 = vadd.f32 %v888, 1.0
          %v932 = vadd.f32 %v890, 1.0
          %v933 = vadd.f32 %v892, 1.0
          %v934 = vadd.f32 %v894, 1.0
          %v935 = vadd.f32 %v896, 1.0
          %v936 = vadd.f32 %v898, 1.0
          %v937 = vadd.f32 %v900, 1.0
          %v938 = vadd.f32 %v902, 1.0
          %v939 = vadd.f32 %v904, 1.0
          %v940 = vadd.f32 %v906, 1.0
          %v941 = vadd.f32 %v908, 1.0
          %v942 = vadd.f32 %v910, 1.0
          %v943 = vrcp.pop %v911
          %v944 = vmul.f32 1.0, %v943
          %v945 = vrcp.pop %v912
          %v946 = vmul.f32 1.0, %v945
          %v947 = vrcp.pop %v913
          %v948 = vmul.f32 1.0, %v947
          %v949 = vrcp.pop %v914
          %v950 = vmul.f32 1.0, %v949
          %v951 = vrcp.pop %v915
          %v952 = vmul.f32 1.0, %v951
          %v953 = vrcp.pop %v916
          %v954 = vmul.f32 1.0, %v953
          %v955 = vrcp.pop %v917
          %v956 = vmul.f32 1.0, %v955
          %v957 = vrcp.pop %v918
          %v958 = vmul.f32 1.0, %v957
          %v959 = vrcp.pop %v919
          %v960 = vmul.f32 1.0, %v959
          %v961 = vrcp.pop %v920
          %v962 = vmul.f32 1.0, %v961
          %v963 = vrcp.pop %v921
          %v964 = vmul.f32 1.0, %v963
          %v965 = vrcp.pop %v922
          %v966 = vmul.f32 1.0, %v965
          %v967 = vrcp.pop %v923
          %v968 = vmul.f32 1.0, %v967
          %v969 = vrcp.pop %v924
          %v970 = vmul.f32 1.0, %v969
          %v971 = vrcp.pop %v925
          %v972 = vmul.f32 1.0, %v971
          %v973 = vrcp.pop %v926
          %v974 = vmul.f32 1.0, %v973
          %v975 = vrcp.pop %v927
          %v976 = vmul.f32 1.0, %v975
          %v977 = vrcp.pop %v928
          %v978 = vmul.f32 1.0, %v977
          %v979 = vrcp.pop %v929
          %v980 = vmul.f32 1.0, %v979
          %v981 = vrcp.pop %v930
          %v982 = vmul.f32 1.0, %v981
          %v983 = vrcp.pop %v931
          %v984 = vmul.f32 1.0, %v983
          %v985 = vrcp.pop %v932
          %v986 = vmul.f32 1.0, %v985
          %v987 = vrcp.pop %v933
          %v988 = vmul.f32 1.0, %v987
          %v989 = vrcp.pop %v934
          %v990 = vmul.f32 1.0, %v989
          %v991 = vrcp.pop %v935
          %v992 = vmul.f32 1.0, %v991
          %v993 = vrcp.pop %v936
          %v994 = vmul.f32 1.0, %v993
          %v995 = vrcp.pop %v937
          %v996 = vmul.f32 1.0, %v995
          %v997 = vrcp.pop %v938
          %v998 = vmul.f32 1.0, %v997
          %v999 = vrcp.pop %v939
          %v1000 = vmul.f32 1.0, %v999
          %v1001 = vrcp.pop %v940
          %v1002 = vmul.f32 1.0, %v1001
          %v1003 = vrcp.pop %v941
          %v1004 = vmul.f32 1.0, %v1003
          %v1005 = vrcp.pop %v942
          %v1006 = vmul.f32 1.0, %v1005
          %v1007 = vmul.f32 %v783, %v944
          %v1008 = vmul.f32 %v784, %v946
          %v1009 = vmul.f32 %v785, %v948
          %v1010 = vmul.f32 %v786, %v950
          %v1011 = vmul.f32 %v787, %v952
          %v1012 = vmul.f32 %v788, %v954
          %v1013 = vmul.f32 %v789, %v956
          %v1014 = vmul.f32 %v790, %v958
          %v1015 = vmul.f32 %v791, %v960
          %v1016 = vmul.f32 %v792, %v962
          %v1017 = vmul.f32 %v793, %v964
          %v1018 = vmul.f32 %v794, %v966
          %v1019 = vmul.f32 %v795, %v968
          %v1020 = vmul.f32 %v796, %v970
          %v1021 = vmul.f32 %v797, %v972
          %v1022 = vmul.f32 %v798, %v974
          %v1023 = vmul.f32 %v799, %v976
          %v1024 = vmul.f32 %v800, %v978
          %v1025 = vmul.f32 %v801, %v980
          %v1026 = vmul.f32 %v802, %v982
          %v1027 = vmul.f32 %v803, %v984
          %v1028 = vmul.f32 %v804, %v986
          %v1029 = vmul.f32 %v805, %v988
          %v1030 = vmul.f32 %v806, %v990
          %v1031 = vmul.f32 %v807, %v992
          %v1032 = vmul.f32 %v808, %v994
          %v1033 = vmul.f32 %v809, %v996
          %v1034 = vmul.f32 %v810, %v998
          %v1035 = vmul.f32 %v811, %v1000
          %v1036 = vmul.f32 %v812, %v1002
          %v1037 = vmul.f32 %v813, %v1004
          %v1038 = vmul.f32 %v814, %v1006
          %1039 = vst [vmem:[%s287] sm:$0xff] %v1007
          %1040 = vst [vmem:[%s287 + $0x8] sm:$0xff] %v1008
          %1041 = vst [vmem:[%s287 + $0x10] sm:$0xff] %v1009
          %1042 = vst [vmem:[%s287 + $0x18] sm:$0xff] %v1010
          %1043 = vst [vmem:[%s287 + $0x20] sm:$0xff] %v1011
          %1044 = vst [vmem:[%s287 + $0x28] sm:$0xff] %v1012
          %1045 = vst [vmem:[%s287 + $0x30] sm:$0xff] %v1013
          %1046 = vst [vmem:[%s287 + $0x38] sm:$0xff] %v1014
          %1047 = vst [vmem:[%s287 + $0x40] sm:$0xff] %v1015
          %1048 = vst [vmem:[%s287 + $0x48] sm:$0xff] %v1016
          %1049 = vst [vmem:[%s287 + $0x50] sm:$0xff] %v1017
          %1050 = vst [vmem:[%s287 + $0x58] sm:$0xff] %v1018
          %1051 = vst [vmem:[%s287 + $0x60] sm:$0xff] %v1019
          %1052 = vst [vmem:[%s287 + $0x68] sm:$0xff] %v1020
          %1053 = vst [vmem:[%s287 + $0x70] sm:$0xff] %v1021
          %1054 = vst [vmem:[%s287 + $0x78] sm:$0xff] %v1022
          %1055 = vst [vmem:[%s287 + $0x80] sm:$0xff] %v1023
          %1056 = vst [vmem:[%s287 + $0x88] sm:$0xff] %v1024
          %1057 = vst [vmem:[%s287 + $0x90] sm:$0xff] %v1025
          %1058 = vst [vmem:[%s287 + $0x98] sm:$0xff] %v1026
          %1059 = vst [vmem:[%s287 + $0xa0] sm:$0xff] %v1027
          %1060 = vst [vmem:[%s287 + $0xa8] sm:$0xff] %v1028
          %1061 = vst [vmem:[%s287 + $0xb0] sm:$0xff] %v1029
          %1062 = vst [vmem:[%s287 + $0xb8] sm:$0xff] %v1030
          %1063 = vst [vmem:[%s287 + $0xc0] sm:$0xff] %v1031
          %1064 = vst [vmem:[%s287 + $0xc8] sm:$0xff] %v1032
          %1065 = vst [vmem:[%s287 + $0xd0] sm:$0xff] %v1033
          %1066 = vst [vmem:[%s287 + $0xd8] sm:$0xff] %v1034
          %1067 = vst [vmem:[%s287 + $0xe0] sm:$0xff] %v1035
          %1068 = vst [vmem:[%s287 + $0xe8] sm:$0xff] %v1036
          %1069 = vst [vmem:[%s287 + $0xf0] sm:$0xff] %v1037
          %1070 = vst [vmem:[%s287 + $0xf8] sm:$0xff] %v1038
        $region52: #{tpu_custom_call.1} parent=35 // pred_fallthru
          _
        %s1071 = sand.u32 %s159, 1
        %s1072 = scalar_lea.sflag [#allocation5], %s1071
        %s1073 = sand.u32 %s159, 1
        %s1074 = smul.addr %s1073, 256
        %s1075 = scalar_lea.vmem [#allocation8], %s1074
        // Predicated region
        $region53: #{tpu_custom_call.1} parent=35 // pred_check
          %p1076 = pneg %p169
        $region54: #{tpu_custom_call.1} parent=35 // pred_check_branch
          %1078 = sbr.rel (%p1076) target = $region56
        $region55: #{tpu_custom_call.1} parent=35 // pred_region
          %s1079 = smul.u32 32, %s27
          %s1081 = ssub.s32 4096, 4096
          %1082 = vsyncadd %s1072, %s1081
          %s1083 = sadd.s32 %s28, %s1079
          %s1084 = smul.addr %s1083, 128
          %s1085 = scalar_lea.hbm %s4, %s1084
          %s1086 = sshll.u32 %s1075, 4
          %s1087 = int_to_ptr.vmem [resolvable:$true] %s1086
          %1092 = dma.vmem_to_hbm [thread:$0]  %s1087, 4096, %s1085, %s1072, 128, 128, 8
        $region56: #{tpu_custom_call.1} parent=35 // pred_fallthru
          _
      $region36: #{tpu_custom_call.1} parent=5 // pred_fallthru
        _
      %p1093 = scmp.le.s32.totalorder 2, %s17
      // Predicated region
      $region57: #{tpu_custom_call.1} parent=5 // pred_check
        %p1094 = pneg %p1093
      $region58: #{tpu_custom_call.1} parent=5 // pred_check_branch
        %1096 = sbr.rel (%p1094) target = $region60
      $region59: #{tpu_custom_call.1} parent=5 // pred_region
        %s1097 = ssub.s32 %s17, 2
        // Predicated region
        $region61: #{tpu_custom_call.1} parent=59 // pred_check
          %p1098 = pneg %p175
        $region62: #{tpu_custom_call.1} parent=59 // pred_check_branch
          %1100 = sbr.rel (%p1098) target = $region64
        $region63: #{tpu_custom_call.1} parent=59 // pred_region
          %s1101 = sand.u32 %s160, 1
          %s1102 = scalar_lea.sflag [#allocation5], %s1101
          %s1103 = sand.u32 %s160, 1
          %s1104 = smul.addr %s1103, 256
          %s1105 = scalar_lea.vmem [#allocation8], %s1104
          %1106 = dma.done %s1102, 4096
        $region64: #{tpu_custom_call.1} parent=59 // pred_fallthru
          _
      $region60: #{tpu_custom_call.1} parent=5 // pred_fallthru
        _
    $region6: #{tpu_custom_call.1} parent=1 // loop_footer
      %s21 = sadd.s32 1, %s17
    $region7: #{tpu_custom_call.1} parent=1 // loop_footer_branch
      %16 = sbr.rel target = $region3
    $region8: #{tpu_custom_call.1} parent=1 // loop_exit
      _
    %1107 = vsyncpa [#allocation4], 1
    %s1108 = scalar_lea.sflag [#allocation4], 1
    %1109 = vsyncpa %s1108, 1
    %1110 = vsyncpa [#allocation7], 1
    %1111 = vsyncpa [#allocation5], 1
    %s1112 = scalar_lea.sflag [#allocation5], 1
    %1113 = vsyncpa %s1112, 1

</llo_original>
